<compile_context>
chip_gen: v7x
topology: tpu7x:2x2x1
jax: 0.10.0
libtpu: 0.0.40
codegen_flags: <defaults>
</compile_context>

<pallas_src>
import functools

import jax
import jax.numpy as jnp
import numpy as np
from jax.experimental import pallas as pl
from jax.experimental.pallas import tpu as pltpu

_LANES = 128   # vreg lane width


def _detect_tensorcore_count():
    """2 on chips with two TensorCores (v7x / megacore), else 1 (v5e / v6e)."""
    try:
        info = pltpu.get_tpu_info()
        for name in ("num_tensorcores", "tensorcore_count", "num_cores", "core_count"):
            v = getattr(info, name, None)
            if isinstance(v, int) and v > 0:
                return min(int(v), 2)
    except Exception:
        pass
    try:
        v = getattr(jax.devices()[0], "num_cores", None)
        if isinstance(v, int) and v > 0:
            return min(int(v), 2)
    except Exception:
        pass
    return 1


_NUM_TC = _detect_tensorcore_count()


# ----------------------------------------------------------------------------
# Per-cell box / confidence terms on one channel-major block.
# ----------------------------------------------------------------------------
def _box_terms(x_ref):
    """x_ref: (15, TR, 128) block ref.  Channel layout on the leading axis:
         0..4   predictor-1 [x, y, w, h, conf]   (raw outputs channels 0..4)
         5..9   predictor-2 [x, y, w, h, conf]   (raw outputs channels 5..9)
         10..14 target      [conf, x, y, w, h]   (raw targets channels 0..4)
       Returns the (TR, 128) elementwise weighted squared-error term.
    """
    t_conf = x_ref[10]
    obj = t_conf == 1.0                      # object mask (padded cells are all-zero)

    tx, ty, tw, th = x_ref[11], x_ref[12], x_ref[13], x_ref[14]

    # Target corners.  Per-cell grid offsets cancel in IOU -> omitted;
    # the x0.5 is folded into the scale (w*448*0.5 == w*224).
    txc = tx * 64.0
    tyc = ty * 64.0
    twh = tw * 224.0
    thh = th * 224.0
    tx0 = txc - twh
    tx1 = txc + twh
    ty0 = tyc - thh
    ty1 = tyc + thh
    t_area = (tx1 - tx0) * (ty1 - ty0)

    def iou(bx, by, bw, bh):
        xc = bx * 64.0
        yc = by * 64.0
        wh = bw * 224.0
        hh = bh * 224.0
        x0 = xc - wh
        x1 = xc + wh
        y0 = yc - hh
        y1 = yc + hh
        iw = jnp.maximum(jnp.minimum(x1, tx1) - jnp.maximum(x0, tx0), 0.0)
        ih = jnp.maximum(jnp.minimum(y1, ty1) - jnp.maximum(y0, ty0), 0.0)
        inter = iw * ih
        b_area = (x1 - x0) * (y1 - y0)
        # Exact division on purpose: the IOUs only feed the `>` selection; an
        # approximate reciprocal could flip near-ties vs. the torch module.
        return inter / (b_area + t_area - inter)

    # IOU on the RAW predictor channels: at obj cells the torch mask is the
    # identity, and at non-obj / padded cells pick1 is irrelevant because the
    # selected values are re-masked below.
    pick1 = (iou(x_ref[0], x_ref[1], x_ref[2], x_ref[3])
             > iou(x_ref[5], x_ref[6], x_ref[7], x_ref[8]))

    def pick(a, b):
        # responsible / non-responsible predictor channel, obj-masked once.
        return jnp.where(obj, jnp.where(pick1, a, b), 0.0)

    dx = pick(x_ref[0], x_ref[5]) - tx
    dy = pick(x_ref[1], x_ref[6]) - ty
    dw = pick(x_ref[2], x_ref[7]) - tw
    dh = pick(x_ref[3], x_ref[8]) - th
    dc = pick(x_ref[4], x_ref[9]) - t_conf
    other_conf = pick(x_ref[9], x_ref[4])    # the other predictor's confidence

    return (5.0 * (dx * dx + dy * dy + dw * dw + dh * dh)
            + dc * dc + other_conf * other_conf)


# ----------------------------------------------------------------------------
# Kernels.
# ----------------------------------------------------------------------------
def _box_loss_kernel_single(x_ref, o_ref):
    """Small-N fast path: whole slab in one block, one grid step, no bookkeeping."""
    term = _box_terms(x_ref)                               # (rows_p, 128)
    o_ref[...] = term.reshape(-1, 8, _LANES).sum(axis=0)   # (8, 128) lane-dense partial


def _box_loss_kernel_grid(x_ref, o_ref):
    """Pipelined path: grid=(cores, tiles); (1,8,128) output block resident across
    the tile axis acts as the per-core accumulator (no scratch, no final reduce)."""
    t = pl.program_id(1)

    @pl.when(t == 0)
    def _init():
        o_ref[...] = jnp.zeros_like(o_ref)

    term = _box_terms(x_ref)                               # (tile_rows, 128)
    o_ref[...] += term.reshape(-1, 8, _LANES).sum(axis=0)[None]


# ----------------------------------------------------------------------------
# Wrapper.
# ----------------------------------------------------------------------------
@functools.partial(jax.jit, static_argnames=("tile_rows", "fast_max_rows", "num_cores"))
def yolo_loss_pallas(outputs, targets, *, tile_rows=512, fast_max_rows=512,
                     num_cores=None):
    """outputs, targets: (B, S1, S2, 30) float32.  Returns the scalar YOLO-v1 loss."""
    B, S1, S2, C = outputs.shape
    assert C == 30 and targets.shape == outputs.shape
    outputs = outputs.astype(jnp.float32)
    targets = targets.astype(jnp.float32)
    N = B * S1 * S2
    if num_cores is None:
        num_cores = _NUM_TC

    # ---- class-probability term: elementwise + sum, layout agnostic ----------
    # Evaluated on the native channels-last layout (single fused XLA
    # read-and-reduce) so the 20 class channels never pay the channel-major
    # transpose below.
    obj_mask = targets[..., 0:1] == 1.0
    cls_diff = jnp.where(obj_mask, outputs[..., 10:30], 0.0) - targets[..., 10:30]
    class_loss = jnp.sum(cls_diff * cls_diff)

    # ---- box / confidence terms: channel-major Pallas kernel -----------------
    rows = pl.cdiv(N, _LANES)
    fast = rows <= fast_max_rows
    row_align = 8 if fast else num_cores * tile_rows
    rows_p = pl.cdiv(rows, row_align) * row_align
    n_pad = rows_p * _LANES - N

    # One (N, 15) slab -> a single pad + transpose feeding one pallas_call input.
    # TODO(synk): repack inside the kernel from a pl.ANY-resident (N, 30) input to
    # drop this extra HBM pass entirely.
    slab = jnp.concatenate(
        [outputs.reshape(N, C)[:, 0:10], targets.reshape(N, C)[:, 0:5]], axis=1)
    slab = jnp.pad(slab, ((0, n_pad), (0, 0)))
    slab = slab.T.reshape(15, rows_p, _LANES)

    if fast:
        partial = pl.pallas_call(
            _box_loss_kernel_single,
            out_shape=jax.ShapeDtypeStruct((8, _LANES), jnp.float32),
            grid=(1,),
            in_specs=[pl.BlockSpec((15, rows_p, _LANES), lambda i: (0, 0, 0))],
            out_specs=pl.BlockSpec((8, _LANES), lambda i: (0, 0)),
        )(slab)
    else:
        tiles_per_core = rows_p // (num_cores * tile_rows)
        partial = pl.pallas_call(
            _box_loss_kernel_grid,
            out_shape=jax.ShapeDtypeStruct((num_cores, 8, _LANES), jnp.float32),
            grid=(num_cores, tiles_per_core),
            in_specs=[pl.BlockSpec(
                (15, tile_rows, _LANES),
                lambda c, t: (0, c * tiles_per_core + t, 0))],
            out_specs=pl.BlockSpec((1, 8, _LANES), lambda c, t: (c, 0, 0)),
            compiler_params=pltpu.CompilerParams(
                dimension_semantics=("parallel", "arbitrary")),
            # Note: at tile_rows=512 the double-buffered input is ~7.9 MiB, inside
            # every generation's default scoped VMEM; set vmem_limit_bytes only if
            # raising tile_rows to 1024 on v5e.
        )(slab)

    return class_loss + jnp.sum(partial)


# ----------------------------------------------------------------------------
# Pure-JAX reference (faithful mirror of the PyTorch forward, with grid offsets).
# ----------------------------------------------------------------------------
def yolo_loss_ref(outputs, targets):
    B, S1, S2, C = outputs.shape
    obj = (targets[..., 0] == 1.0)[..., None]
    obj_out = jnp.where(obj, outputs, 0.0)

    loss = jnp.sum((obj_out[..., 10:30] - targets[..., 10:30]) ** 2)

    set1 = obj_out[..., 0:5]
    set2 = obj_out[..., 5:10]
    tb = targets[..., 0:5]

    ii = jnp.arange(S1, dtype=jnp.float32).reshape(1, S1, 1)
    jj = jnp.arange(S2, dtype=jnp.float32).reshape(1, 1, S2)

    def transform(x, y, w, h):
        x = x * 64.0 + jj * 64.0
        y = y * 64.0 + ii * 64.0
        w = w * 448.0
        h = h * 448.0
        x = x - w / 2
        y = y - h / 2
        w = w + x
        h = h + y
        return x, y, w, h

    tx0, ty0, tx1, ty1 = transform(tb[..., 1], tb[..., 2], tb[..., 3], tb[..., 4])
    t_area = (tx1 - tx0) * (ty1 - ty0)

    def iou(b):
        bx0, by0, bx1, by1 = transform(b[..., 0], b[..., 1], b[..., 2], b[..., 3])
        inter = (jnp.maximum(jnp.minimum(bx1, tx1) - jnp.maximum(bx0, tx0), 0.0)
                 * jnp.maximum(jnp.minimum(by1, ty1) - jnp.maximum(by0, ty0), 0.0))
        b_area = (bx1 - bx0) * (by1 - by0)
        return inter / (b_area + t_area - inter)

    mask = (iou(set1) > iou(set2))[..., None]
    best = jnp.where(mask, set1, set2)
    other = jnp.where(~mask, set1, set2)

    loss += (5.0 * jnp.sum((best[..., 0] - tb[..., 1]) ** 2)
             + 5.0 * jnp.sum((best[..., 1] - tb[..., 2]) ** 2)
             + 5.0 * jnp.sum((best[..., 2] - tb[..., 3]) ** 2)
             + 5.0 * jnp.sum((best[..., 3] - tb[..., 4]) ** 2)
             + jnp.sum((best[..., 4] - tb[..., 0]) ** 2))
    loss += jnp.sum(other[..., 4] ** 2)
    return loss


if __name__ == "__main__":
    B, S1, S2, C = 2, 7, 7, 30   # YOLO-v1: 7x7 grid, 448px image, 64px cells

    key = jax.random.PRNGKey(0)
    k1, k2, k3 = jax.random.split(key, 3)
    outputs = jax.random.normal(k1, (B, S1, S2, C), dtype=jnp.float32)
    tgt_rest = jax.random.uniform(k2, (B, S1, S2, C - 1), dtype=jnp.float32)
    tgt_obj = (jax.random.uniform(k3, (B, S1, S2, 1)) > 0.5).astype(jnp.float32)
    targets = jnp.concatenate([tgt_obj, tgt_rest], axis=-1)

    loss_reference = jax.block_until_ready(yolo_loss_ref(outputs, targets))

    # Default configuration: takes the single-step fast path at this size.
    loss_kernel = jax.block_until_ready(yolo_loss_pallas(outputs, targets))
    np.testing.assert_allclose(np.asarray(loss_kernel), np.asarray(loss_reference),
                               rtol=1e-4, atol=1e-3)

    # Also exercise the pipelined multi-tile path (forced, tiny tiles) for coverage.
    loss_grid = jax.block_until_ready(
        yolo_loss_pallas(outputs, targets, tile_rows=8, fast_max_rows=0))
    np.testing.assert_allclose(np.asarray(loss_grid), np.asarray(loss_reference),
                               rtol=1e-4, atol=1e-3)

    print("KERNEL_OK")
</pallas_src>

<mosaic_0001>
module attributes {stable_mosaic.version = 11 : i64} {
  func.func @_box_loss_kernel_single(%arg0: i32, %arg1: memref<15x8x128xf32, #tpu.memory_space<vmem>>, %arg2: memref<8x128xf32, #tpu.memory_space<vmem>>) attributes {dimension_semantics = [#tpu.dimension_semantics<arbitrary>], iteration_bounds = array<i64: 1>, scalar_prefetch = 0 : i64, scratch_operands = 0 : i64, tpu.core_type = #tpu.core_type<tc>, window_params = [{pipeline_mode = #tpu.pipeline_mode<synchronous>, transform_indices = @transform_0, window_bounds = array<i64: 15, 8, 128>}, {pipeline_mode = #tpu.pipeline_mode<synchronous>, transform_indices = @transform_1, window_bounds = array<i64: 8, 128>}]} {
    %c10 = arith.constant 10 : index
    %c0 = arith.constant 0 : index
    %c0_0 = arith.constant 0 : index
    %0 = vector.load %arg1[%c10, %c0, %c0_0] : memref<15x8x128xf32, #tpu.memory_space<vmem>>, vector<1x8x128xf32>
    %1 = vector.shape_cast %0 : vector<1x8x128xf32> to vector<8x128xf32>
    %cst = arith.constant 1.000000e+00 : f32
    %2 = vector.broadcast %cst : f32 to vector<8x128xf32>
    %3 = arith.cmpf oeq, %1, %2 : vector<8x128xf32>
    %c11 = arith.constant 11 : index
    %c0_1 = arith.constant 0 : index
    %c0_2 = arith.constant 0 : index
    %4 = vector.load %arg1[%c11, %c0_1, %c0_2] : memref<15x8x128xf32, #tpu.memory_space<vmem>>, vector<1x8x128xf32>
    %5 = vector.shape_cast %4 : vector<1x8x128xf32> to vector<8x128xf32>
    %c12 = arith.constant 12 : index
    %c0_3 = arith.constant 0 : index
    %c0_4 = arith.constant 0 : index
    %6 = vector.load %arg1[%c12, %c0_3, %c0_4] : memref<15x8x128xf32, #tpu.memory_space<vmem>>, vector<1x8x128xf32>
    %7 = vector.shape_cast %6 : vector<1x8x128xf32> to vector<8x128xf32>
    %c13 = arith.constant 13 : index
    %c0_5 = arith.constant 0 : index
    %c0_6 = arith.constant 0 : index
    %8 = vector.load %arg1[%c13, %c0_5, %c0_6] : memref<15x8x128xf32, #tpu.memory_space<vmem>>, vector<1x8x128xf32>
    %9 = vector.shape_cast %8 : vector<1x8x128xf32> to vector<8x128xf32>
    %c14 = arith.constant 14 : index
    %c0_7 = arith.constant 0 : index
    %c0_8 = arith.constant 0 : index
    %10 = vector.load %arg1[%c14, %c0_7, %c0_8] : memref<15x8x128xf32, #tpu.memory_space<vmem>>, vector<1x8x128xf32>
    %11 = vector.shape_cast %10 : vector<1x8x128xf32> to vector<8x128xf32>
    %cst_9 = arith.constant 6.400000e+01 : f32
    %12 = vector.broadcast %cst_9 : f32 to vector<8x128xf32>
    %13 = arith.mulf %5, %12 : vector<8x128xf32>
    %cst_10 = arith.constant 6.400000e+01 : f32
    %14 = vector.broadcast %cst_10 : f32 to vector<8x128xf32>
    %15 = arith.mulf %7, %14 : vector<8x128xf32>
    %cst_11 = arith.constant 2.240000e+02 : f32
    %16 = vector.broadcast %cst_11 : f32 to vector<8x128xf32>
    %17 = arith.mulf %9, %16 : vector<8x128xf32>
    %cst_12 = arith.constant 2.240000e+02 : f32
    %18 = vector.broadcast %cst_12 : f32 to vector<8x128xf32>
    %19 = arith.mulf %11, %18 : vector<8x128xf32>
    %20 = arith.subf %13, %17 : vector<8x128xf32>
    %21 = arith.addf %13, %17 : vector<8x128xf32>
    %22 = arith.subf %15, %19 : vector<8x128xf32>
    %23 = arith.addf %15, %19 : vector<8x128xf32>
    %24 = arith.subf %21, %20 : vector<8x128xf32>
    %25 = arith.subf %23, %22 : vector<8x128xf32>
    %26 = arith.mulf %24, %25 : vector<8x128xf32>
    %c0_13 = arith.constant 0 : index
    %c0_14 = arith.constant 0 : index
    %c0_15 = arith.constant 0 : index
    %27 = vector.load %arg1[%c0_13, %c0_14, %c0_15] : memref<15x8x128xf32, #tpu.memory_space<vmem>>, vector<1x8x128xf32>
    %28 = vector.shape_cast %27 : vector<1x8x128xf32> to vector<8x128xf32>
    %c1 = arith.constant 1 : index
    %c0_16 = arith.constant 0 : index
    %c0_17 = arith.constant 0 : index
    %29 = vector.load %arg1[%c1, %c0_16, %c0_17] : memref<15x8x128xf32, #tpu.memory_space<vmem>>, vector<1x8x128xf32>
    %30 = vector.shape_cast %29 : vector<1x8x128xf32> to vector<8x128xf32>
    %c2 = arith.constant 2 : index
    %c0_18 = arith.constant 0 : index
    %c0_19 = arith.constant 0 : index
    %31 = vector.load %arg1[%c2, %c0_18, %c0_19] : memref<15x8x128xf32, #tpu.memory_space<vmem>>, vector<1x8x128xf32>
    %32 = vector.shape_cast %31 : vector<1x8x128xf32> to vector<8x128xf32>
    %c3 = arith.constant 3 : index
    %c0_20 = arith.constant 0 : index
    %c0_21 = arith.constant 0 : index
    %33 = vector.load %arg1[%c3, %c0_20, %c0_21] : memref<15x8x128xf32, #tpu.memory_space<vmem>>, vector<1x8x128xf32>
    %34 = vector.shape_cast %33 : vector<1x8x128xf32> to vector<8x128xf32>
    %cst_22 = arith.constant 6.400000e+01 : f32
    %35 = vector.broadcast %cst_22 : f32 to vector<8x128xf32>
    %36 = arith.mulf %28, %35 : vector<8x128xf32>
    %cst_23 = arith.constant 6.400000e+01 : f32
    %37 = vector.broadcast %cst_23 : f32 to vector<8x128xf32>
    %38 = arith.mulf %30, %37 : vector<8x128xf32>
    %cst_24 = arith.constant 2.240000e+02 : f32
    %39 = vector.broadcast %cst_24 : f32 to vector<8x128xf32>
    %40 = arith.mulf %32, %39 : vector<8x128xf32>
    %cst_25 = arith.constant 2.240000e+02 : f32
    %41 = vector.broadcast %cst_25 : f32 to vector<8x128xf32>
    %42 = arith.mulf %34, %41 : vector<8x128xf32>
    %43 = arith.subf %36, %40 : vector<8x128xf32>
    %44 = arith.addf %36, %40 : vector<8x128xf32>
    %45 = arith.subf %38, %42 : vector<8x128xf32>
    %46 = arith.addf %38, %42 : vector<8x128xf32>
    %47 = arith.minimumf %44, %21 : vector<8x128xf32>
    %48 = arith.maximumf %43, %20 : vector<8x128xf32>
    %49 = arith.subf %47, %48 : vector<8x128xf32>
    %cst_26 = arith.constant 0.000000e+00 : f32
    %50 = vector.broadcast %cst_26 : f32 to vector<8x128xf32>
    %51 = arith.maximumf %49, %50 : vector<8x128xf32>
    %52 = arith.minimumf %46, %23 : vector<8x128xf32>
    %53 = arith.maximumf %45, %22 : vector<8x128xf32>
    %54 = arith.subf %52, %53 : vector<8x128xf32>
    %cst_27 = arith.constant 0.000000e+00 : f32
    %55 = vector.broadcast %cst_27 : f32 to vector<8x128xf32>
    %56 = arith.maximumf %54, %55 : vector<8x128xf32>
    %57 = arith.mulf %51, %56 : vector<8x128xf32>
    %58 = arith.subf %44, %43 : vector<8x128xf32>
    %59 = arith.subf %46, %45 : vector<8x128xf32>
    %60 = arith.mulf %58, %59 : vector<8x128xf32>
    %61 = arith.addf %60, %26 : vector<8x128xf32>
    %62 = arith.subf %61, %57 : vector<8x128xf32>
    %63 = arith.divf %57, %62 : vector<8x128xf32>
    %c5 = arith.constant 5 : index
    %c0_28 = arith.constant 0 : index
    %c0_29 = arith.constant 0 : index
    %64 = vector.load %arg1[%c5, %c0_28, %c0_29] : memref<15x8x128xf32, #tpu.memory_space<vmem>>, vector<1x8x128xf32>
    %65 = vector.shape_cast %64 : vector<1x8x128xf32> to vector<8x128xf32>
    %c6 = arith.constant 6 : index
    %c0_30 = arith.constant 0 : index
    %c0_31 = arith.constant 0 : index
    %66 = vector.load %arg1[%c6, %c0_30, %c0_31] : memref<15x8x128xf32, #tpu.memory_space<vmem>>, vector<1x8x128xf32>
    %67 = vector.shape_cast %66 : vector<1x8x128xf32> to vector<8x128xf32>
    %c7 = arith.constant 7 : index
    %c0_32 = arith.constant 0 : index
    %c0_33 = arith.constant 0 : index
    %68 = vector.load %arg1[%c7, %c0_32, %c0_33] : memref<15x8x128xf32, #tpu.memory_space<vmem>>, vector<1x8x128xf32>
    %69 = vector.shape_cast %68 : vector<1x8x128xf32> to vector<8x128xf32>
    %c8 = arith.constant 8 : index
    %c0_34 = arith.constant 0 : index
    %c0_35 = arith.constant 0 : index
    %70 = vector.load %arg1[%c8, %c0_34, %c0_35] : memref<15x8x128xf32, #tpu.memory_space<vmem>>, vector<1x8x128xf32>
    %71 = vector.shape_cast %70 : vector<1x8x128xf32> to vector<8x128xf32>
    %cst_36 = arith.constant 6.400000e+01 : f32
    %72 = vector.broadcast %cst_36 : f32 to vector<8x128xf32>
    %73 = arith.mulf %65, %72 : vector<8x128xf32>
    %cst_37 = arith.constant 6.400000e+01 : f32
    %74 = vector.broadcast %cst_37 : f32 to vector<8x128xf32>
    %75 = arith.mulf %67, %74 : vector<8x128xf32>
    %cst_38 = arith.constant 2.240000e+02 : f32
    %76 = vector.broadcast %cst_38 : f32 to vector<8x128xf32>
    %77 = arith.mulf %69, %76 : vector<8x128xf32>
    %cst_39 = arith.constant 2.240000e+02 : f32
    %78 = vector.broadcast %cst_39 : f32 to vector<8x128xf32>
    %79 = arith.mulf %71, %78 : vector<8x128xf32>
    %80 = arith.subf %73, %77 : vector<8x128xf32>
    %81 = arith.addf %73, %77 : vector<8x128xf32>
    %82 = arith.subf %75, %79 : vector<8x128xf32>
    %83 = arith.addf %75, %79 : vector<8x128xf32>
    %84 = arith.minimumf %81, %21 : vector<8x128xf32>
    %85 = arith.maximumf %80, %20 : vector<8x128xf32>
    %86 = arith.subf %84, %85 : vector<8x128xf32>
    %cst_40 = arith.constant 0.000000e+00 : f32
    %87 = vector.broadcast %cst_40 : f32 to vector<8x128xf32>
    %88 = arith.maximumf %86, %87 : vector<8x128xf32>
    %89 = arith.minimumf %83, %23 : vector<8x128xf32>
    %90 = arith.maximumf %82, %22 : vector<8x128xf32>
    %91 = arith.subf %89, %90 : vector<8x128xf32>
    %cst_41 = arith.constant 0.000000e+00 : f32
    %92 = vector.broadcast %cst_41 : f32 to vector<8x128xf32>
    %93 = arith.maximumf %91, %92 : vector<8x128xf32>
    %94 = arith.mulf %88, %93 : vector<8x128xf32>
    %95 = arith.subf %81, %80 : vector<8x128xf32>
    %96 = arith.subf %83, %82 : vector<8x128xf32>
    %97 = arith.mulf %95, %96 : vector<8x128xf32>
    %98 = arith.addf %97, %26 : vector<8x128xf32>
    %99 = arith.subf %98, %94 : vector<8x128xf32>
    %100 = arith.divf %94, %99 : vector<8x128xf32>
    %101 = arith.cmpf ogt, %63, %100 : vector<8x128xf32>
    %c0_42 = arith.constant 0 : index
    %c0_43 = arith.constant 0 : index
    %c0_44 = arith.constant 0 : index
    %102 = vector.load %arg1[%c0_42, %c0_43, %c0_44] : memref<15x8x128xf32, #tpu.memory_space<vmem>>, vector<1x8x128xf32>
    %103 = vector.shape_cast %102 : vector<1x8x128xf32> to vector<8x128xf32>
    %c5_45 = arith.constant 5 : index
    %c0_46 = arith.constant 0 : index
    %c0_47 = arith.constant 0 : index
    %104 = vector.load %arg1[%c5_45, %c0_46, %c0_47] : memref<15x8x128xf32, #tpu.memory_space<vmem>>, vector<1x8x128xf32>
    %105 = vector.shape_cast %104 : vector<1x8x128xf32> to vector<8x128xf32>
    %106 = arith.select %101, %103, %105 : vector<8x128xi1>, vector<8x128xf32>
    %cst_48 = arith.constant 0.000000e+00 : f32
    %107 = vector.broadcast %cst_48 : f32 to vector<8x128xf32>
    %108 = arith.select %3, %106, %107 : vector<8x128xi1>, vector<8x128xf32>
    %109 = arith.subf %108, %5 : vector<8x128xf32>
    %c1_49 = arith.constant 1 : index
    %c0_50 = arith.constant 0 : index
    %c0_51 = arith.constant 0 : index
    %110 = vector.load %arg1[%c1_49, %c0_50, %c0_51] : memref<15x8x128xf32, #tpu.memory_space<vmem>>, vector<1x8x128xf32>
    %111 = vector.shape_cast %110 : vector<1x8x128xf32> to vector<8x128xf32>
    %c6_52 = arith.constant 6 : index
    %c0_53 = arith.constant 0 : index
    %c0_54 = arith.constant 0 : index
    %112 = vector.load %arg1[%c6_52, %c0_53, %c0_54] : memref<15x8x128xf32, #tpu.memory_space<vmem>>, vector<1x8x128xf32>
    %113 = vector.shape_cast %112 : vector<1x8x128xf32> to vector<8x128xf32>
    %114 = arith.select %101, %111, %113 : vector<8x128xi1>, vector<8x128xf32>
    %cst_55 = arith.constant 0.000000e+00 : f32
    %115 = vector.broadcast %cst_55 : f32 to vector<8x128xf32>
    %116 = arith.select %3, %114, %115 : vector<8x128xi1>, vector<8x128xf32>
    %117 = arith.subf %116, %7 : vector<8x128xf32>
    %c2_56 = arith.constant 2 : index
    %c0_57 = arith.constant 0 : index
    %c0_58 = arith.constant 0 : index
    %118 = vector.load %arg1[%c2_56, %c0_57, %c0_58] : memref<15x8x128xf32, #tpu.memory_space<vmem>>, vector<1x8x128xf32>
    %119 = vector.shape_cast %118 : vector<1x8x128xf32> to vector<8x128xf32>
    %c7_59 = arith.constant 7 : index
    %c0_60 = arith.constant 0 : index
    %c0_61 = arith.constant 0 : index
    %120 = vector.load %arg1[%c7_59, %c0_60, %c0_61] : memref<15x8x128xf32, #tpu.memory_space<vmem>>, vector<1x8x128xf32>
    %121 = vector.shape_cast %120 : vector<1x8x128xf32> to vector<8x128xf32>
    %122 = arith.select %101, %119, %121 : vector<8x128xi1>, vector<8x128xf32>
    %cst_62 = arith.constant 0.000000e+00 : f32
    %123 = vector.broadcast %cst_62 : f32 to vector<8x128xf32>
    %124 = arith.select %3, %122, %123 : vector<8x128xi1>, vector<8x128xf32>
    %125 = arith.subf %124, %9 : vector<8x128xf32>
    %c3_63 = arith.constant 3 : index
    %c0_64 = arith.constant 0 : index
    %c0_65 = arith.constant 0 : index
    %126 = vector.load %arg1[%c3_63, %c0_64, %c0_65] : memref<15x8x128xf32, #tpu.memory_space<vmem>>, vector<1x8x128xf32>
    %127 = vector.shape_cast %126 : vector<1x8x128xf32> to vector<8x128xf32>
    %c8_66 = arith.constant 8 : index
    %c0_67 = arith.constant 0 : index
    %c0_68 = arith.constant 0 : index
    %128 = vector.load %arg1[%c8_66, %c0_67, %c0_68] : memref<15x8x128xf32, #tpu.memory_space<vmem>>, vector<1x8x128xf32>
    %129 = vector.shape_cast %128 : vector<1x8x128xf32> to vector<8x128xf32>
    %130 = arith.select %101, %127, %129 : vector<8x128xi1>, vector<8x128xf32>
    %cst_69 = arith.constant 0.000000e+00 : f32
    %131 = vector.broadcast %cst_69 : f32 to vector<8x128xf32>
    %132 = arith.select %3, %130, %131 : vector<8x128xi1>, vector<8x128xf32>
    %133 = arith.subf %132, %11 : vector<8x128xf32>
    %c4 = arith.constant 4 : index
    %c0_70 = arith.constant 0 : index
    %c0_71 = arith.constant 0 : index
    %134 = vector.load %arg1[%c4, %c0_70, %c0_71] : memref<15x8x128xf32, #tpu.memory_space<vmem>>, vector<1x8x128xf32>
    %135 = vector.shape_cast %134 : vector<1x8x128xf32> to vector<8x128xf32>
    %c9 = arith.constant 9 : index
    %c0_72 = arith.constant 0 : index
    %c0_73 = arith.constant 0 : index
    %136 = vector.load %arg1[%c9, %c0_72, %c0_73] : memref<15x8x128xf32, #tpu.memory_space<vmem>>, vector<1x8x128xf32>
    %137 = vector.shape_cast %136 : vector<1x8x128xf32> to vector<8x128xf32>
    %138 = arith.select %101, %135, %137 : vector<8x128xi1>, vector<8x128xf32>
    %cst_74 = arith.constant 0.000000e+00 : f32
    %139 = vector.broadcast %cst_74 : f32 to vector<8x128xf32>
    %140 = arith.select %3, %138, %139 : vector<8x128xi1>, vector<8x128xf32>
    %141 = arith.subf %140, %1 : vector<8x128xf32>
    %c9_75 = arith.constant 9 : index
    %c0_76 = arith.constant 0 : index
    %c0_77 = arith.constant 0 : index
    %142 = vector.load %arg1[%c9_75, %c0_76, %c0_77] : memref<15x8x128xf32, #tpu.memory_space<vmem>>, vector<1x8x128xf32>
    %143 = vector.shape_cast %142 : vector<1x8x128xf32> to vector<8x128xf32>
    %c4_78 = arith.constant 4 : index
    %c0_79 = arith.constant 0 : index
    %c0_80 = arith.constant 0 : index
    %144 = vector.load %arg1[%c4_78, %c0_79, %c0_80] : memref<15x8x128xf32, #tpu.memory_space<vmem>>, vector<1x8x128xf32>
    %145 = vector.shape_cast %144 : vector<1x8x128xf32> to vector<8x128xf32>
    %146 = arith.select %101, %143, %145 : vector<8x128xi1>, vector<8x128xf32>
    %cst_81 = arith.constant 0.000000e+00 : f32
    %147 = vector.broadcast %cst_81 : f32 to vector<8x128xf32>
    %148 = arith.select %3, %146, %147 : vector<8x128xi1>, vector<8x128xf32>
    %149 = arith.mulf %109, %109 : vector<8x128xf32>
    %150 = arith.mulf %117, %117 : vector<8x128xf32>
    %151 = arith.addf %149, %150 : vector<8x128xf32>
    %152 = arith.mulf %125, %125 : vector<8x128xf32>
    %153 = arith.addf %151, %152 : vector<8x128xf32>
    %154 = arith.mulf %133, %133 : vector<8x128xf32>
    %155 = arith.addf %153, %154 : vector<8x128xf32>
    %cst_82 = arith.constant 5.000000e+00 : f32
    %156 = vector.broadcast %cst_82 : f32 to vector<8x128xf32>
    %157 = arith.mulf %156, %155 : vector<8x128xf32>
    %158 = arith.mulf %141, %141 : vector<8x128xf32>
    %159 = arith.addf %157, %158 : vector<8x128xf32>
    %160 = arith.mulf %148, %148 : vector<8x128xf32>
    %161 = arith.addf %159, %160 : vector<8x128xf32>
    %162 = vector.shape_cast %161 : vector<8x128xf32> to vector<1x8x128xf32>
    %cst_83 = arith.constant dense<0.000000e+00> : vector<8x128xf32>
    %163 = vector.multi_reduction <add>, %162, %cst_83 [0] : vector<1x8x128xf32> to vector<8x128xf32>
    %c0_84 = arith.constant 0 : index
    %c0_85 = arith.constant 0 : index
    %164 = vector.load %arg2[%c0_84, %c0_85] : memref<8x128xf32, #tpu.memory_space<vmem>>, vector<8x128xf32>
    tpu.vector_store %arg2[%c0_84, %c0_85], %163 {strides = array<i32>} : memref<8x128xf32, #tpu.memory_space<vmem>>, vector<8x128xf32>,
    return
  }
  func.func @transform_0(%arg0: i32) -> (i32, i32, i32) {
    %c0_i32 = arith.constant 0 : i32
    %c0_i32_0 = arith.constant 0 : i32
    %c0_i32_1 = arith.constant 0 : i32
    %c0_i32_2 = arith.constant 0 : i32
    return %c0_i32, %c0_i32_0, %c0_i32_1 : i32, i32, i32
  }
  func.func @transform_1(%arg0: i32) -> (i32, i32) {
    %c0_i32 = arith.constant 0 : i32
    %c0_i32_0 = arith.constant 0 : i32
    %c0_i32_1 = arith.constant 0 : i32
    return %c0_i32, %c0_i32_0 : i32, i32
  }
}

</mosaic_0001>

<llo_original>
// kernel: yolo_loss_pallas.1
$region0: #{yolo_loss_pallas.1}
  #allocation0 [shape = 'u32[]', space=smem, size = 0x4, offset = 0x4, fixed_abs, tag = 'smem constant byte address 0x4 - core index']
  #allocation1 [shape = 'u32[144,128]{1,0:T(1,128)}', space=vmem, size = 0x12000, scoped, tag = 'internal scratch']
  %s0 = inlined_call_operand.vmem [shape: f32[15,8,128], index: 0, kind: input, shape index: {}]
  %s1 = inlined_call_operand.vmem [shape: f32[8,128], index: 1, kind: output, shape index: {}]
  %s2 = sld [smem:[#allocation0]]
  $region14: #{yolo_loss_pallas.1} parent=0
    _
  %s4 = ssub.s32 1, %s2
  %s5 = scalar_select 0, %s4, %s2
  // Predicated region
  $region2: #{yolo_loss_pallas.1} parent=0 // pred_check
    _
  $region3: #{yolo_loss_pallas.1} parent=0 // pred_check_branch
    %7 = sbr.rel (0) target = $region5
  $region4: #{yolo_loss_pallas.1} parent=0 // pred_region
    _
  $region5: #{yolo_loss_pallas.1} parent=0 // pred_fallthru
    _
  %s8 = scalar_lea.vmem %s0, 80
  %v9 = vld [vmem:[%s8] sm:$0xff]
  %vm10 = vcmp.eq.f32.partialorder %v9, 1.0
  %s11 = scalar_lea.vmem %s0, 88
  %v12 = vld [vmem:[%s11] sm:$0xff]
  %s13 = scalar_lea.vmem %s0, 96
  %v14 = vld [vmem:[%s13] sm:$0xff]
  %s15 = scalar_lea.vmem %s0, 104
  %v16 = vld [vmem:[%s15] sm:$0xff]
  %s17 = scalar_lea.vmem %s0, 112
  %v18 = vld [vmem:[%s17] sm:$0xff]
  %v19 = vmul.f32 %v12, 64.0
  %v20 = vmul.f32 %v14, 64.0
  %v21 = vmul.f32 %v16, 224.0
  %v22 = vmul.f32 %v18, 224.0
  %v23 = vsub.f32 %v19, %v21
  %v24 = vadd.f32 %v19, %v21
  %v25 = vsub.f32 %v20, %v22
  %v26 = vadd.f32 %v20, %v22
  %v27 = vsub.f32 %v24, %v23
  %v28 = vsub.f32 %v26, %v25
  %v29 = vmul.f32 %v27, %v28
  %v30 = vld [vmem:[%s0] sm:$0xff]
  %s31 = scalar_lea.vmem %s0, 8
  %v32 = vld [vmem:[%s31] sm:$0xff]
  %s33 = scalar_lea.vmem %s0, 16
  %v34 = vld [vmem:[%s33] sm:$0xff]
  %s35 = scalar_lea.vmem %s0, 24
  %v36 = vld [vmem:[%s35] sm:$0xff]
  %v37 = vmul.f32 %v30, 64.0
  %v38 = vmul.f32 %v32, 64.0
  %v39 = vmul.f32 %v34, 224.0
  %v40 = vmul.f32 %v36, 224.0
  %v41 = vsub.f32 %v37, %v39
  %v42 = vadd.f32 %v37, %v39
  %v43 = vsub.f32 %v38, %v40
  %v44 = vadd.f32 %v38, %v40
  %v45 = vmin.f32 %v42, %v24
  %v46 = vmax.f32 %v41, %v23
  %v47 = vsub.f32 %v45, %v46
  %v48 = vmax.f32 %v47, 0.0
  %v49 = vmin.f32 %v44, %v26
  %v50 = vmax.f32 %v43, %v25
  %v51 = vsub.f32 %v49, %v50
  %v52 = vmax.f32 %v51, 0.0
  %v53 = vmul.f32 %v48, %v52
  %v54 = vsub.f32 %v42, %v41
  %v55 = vsub.f32 %v44, %v43
  %v56 = vmul.f32 %v54, %v55
  %v57 = vadd.f32 %v56, %v29
  %v58 = vsub.f32 %v57, %v53
  %v59 = vrcp.pop %v58
  %v60 = vmul.f32 %v53, %v59
  %s61 = scalar_lea.vmem %s0, 40
  %v62 = vld [vmem:[%s61] sm:$0xff]
  %s63 = scalar_lea.vmem %s0, 48
  %v64 = vld [vmem:[%s63] sm:$0xff]
  %s65 = scalar_lea.vmem %s0, 56
  %v66 = vld [vmem:[%s65] sm:$0xff]
  %s67 = scalar_lea.vmem %s0, 64
  %v68 = vld [vmem:[%s67] sm:$0xff]
  %v69 = vmul.f32 %v62, 64.0
  %v70 = vmul.f32 %v64, 64.0
  %v71 = vmul.f32 %v66, 224.0
  %v72 = vmul.f32 %v68, 224.0
  %v73 = vsub.f32 %v69, %v71
  %v74 = vadd.f32 %v69, %v71
  %v75 = vsub.f32 %v70, %v72
  %v76 = vadd.f32 %v70, %v72
  %v77 = vmin.f32 %v74, %v24
  %v78 = vmax.f32 %v73, %v23
  %v79 = vsub.f32 %v77, %v78
  %v80 = vmax.f32 %v79, 0.0
  %v81 = vmin.f32 %v76, %v26
  %v82 = vmax.f32 %v75, %v25
  %v83 = vsub.f32 %v81, %v82
  %v84 = vmax.f32 %v83, 0.0
  %v85 = vmul.f32 %v80, %v84
  %v86 = vsub.f32 %v74, %v73
  %v87 = vsub.f32 %v76, %v75
  %v88 = vmul.f32 %v86, %v87
  %v89 = vadd.f32 %v88, %v29
  %v90 = vsub.f32 %v89, %v85
  %v91 = vrcp.pop %v90
  %v92 = vmul.f32 %v85, %v91
  %vm93 = vcmp.gt.f32.partialorder %v60, %v92
  %v94 = vsel %vm93, %v30, %v62
  %v95 = vsel %vm10, %v94, 0.0
  %v96 = vsub.f32 %v95, %v12
  %v97 = vsel %vm93, %v32, %v64
  %v98 = vsel %vm10, %v97, 0.0
  %v99 = vsub.f32 %v98, %v14
  %v100 = vsel %vm93, %v34, %v66
  %v101 = vsel %vm10, %v100, 0.0
  %v102 = vsub.f32 %v101, %v16
  %v103 = vsel %vm93, %v36, %v68
  %v104 = vsel %vm10, %v103, 0.0
  %v105 = vsub.f32 %v104, %v18
  %s106 = scalar_lea.vmem %s0, 32
  %v107 = vld [vmem:[%s106] sm:$0xff]
  %s108 = scalar_lea.vmem %s0, 72
  %v109 = vld [vmem:[%s108] sm:$0xff]
  %v110 = vsel %vm93, %v107, %v109
  %v111 = vsel %vm10, %v110, 0.0
  %v112 = vsub.f32 %v111, %v9
  %v113 = vsel %vm93, %v109, %v107
  %v114 = vsel %vm10, %v113, 0.0
  %v115 = vmul.f32 %v96, %v96
  %v116 = vmul.f32 %v99, %v99
  %v117 = vadd.f32 %v115, %v116
  %v118 = vmul.f32 %v102, %v102
  %v119 = vadd.f32 %v117, %v118
  %v120 = vmul.f32 %v105, %v105
  %v121 = vadd.f32 %v119, %v120
  %v122 = vmul.f32 %v121, 5.0
  %v123 = vmul.f32 %v112, %v112
  %v124 = vadd.f32 %v122, %v123
  %v125 = vmul.f32 %v114, %v114
  %v126 = vadd.f32 %v124, %v125
  %v127 = vadd.f32 %v126, 0.0
  %128 = vst [vmem:[%s1] sm:$0xff] %v127
  // Predicated region
  $region6: #{yolo_loss_pallas.1} parent=0 // pred_check
    _
  $region7: #{yolo_loss_pallas.1} parent=0 // pred_check_branch
    %130 = sbr.rel (0) target = $region9
  $region8: #{yolo_loss_pallas.1} parent=0 // pred_region
    _
  $region9: #{yolo_loss_pallas.1} parent=0 // pred_fallthru
    _
  // Predicated region
  $region10: #{yolo_loss_pallas.1} parent=0 // pred_check
    _
  $region11: #{yolo_loss_pallas.1} parent=0 // pred_check_branch
    %132 = sbr.rel (0) target = $region13
  $region12: #{yolo_loss_pallas.1} parent=0 // pred_region
    _
  $region13: #{yolo_loss_pallas.1} parent=0 // pred_fallthru
    _

</llo_original>
